<compile_context>
chip_gen: v7x
topology: tpu7x:2x2x1
jax: 0.10.0
libtpu: 0.0.40
codegen_flags: <defaults>
</compile_context>

<pallas_src>
import numpy as np
import jax
import jax.numpy as jnp
from jax import lax
from jax.experimental import pallas as pl
from jax.experimental.pallas import tpu as pltpu

# ---------------- model dims (GCNModule defaults) ----------------
INPUT_DIM = 40     # gcn_intra input dim
HIDDEN_DIM = 72
OUT_DIM = 16       # gcn output dim; gcn_inter input dim is also 16
FINAL_DIM = 24     # out_embedding output dim
F32 = jnp.float32


# ---------------- Pallas kernel: all sequences, grid=(num_sequences,) ----------------
def gcn_module_kernel(nped_ref,                      # SMEM (S,) int32: pedestrians / sequence
                      lab_col_ref, lab_row_ref,      # (1,MAX_N,1) / (1,1,MAX_N) int32 labels
                      x_ref,                         # (1,MAX_N,INPUT_DIM) f32
                      wi0_ref, wi1_ref,              # gcn_intra weights
                      we0_ref, we1_ref,              # gcn_inter weights
                      wa_ref, wb_ref, bout_ref,      # out_embedding split weight + bias
                      out_ref):                      # (1,MAX_N,FINAL_DIM)
    s = pl.program_id(0)
    n = nped_ref[s]                                  # real pedestrian count of this sequence
    max_n = x_ref.shape[1]

    # ---- build row-normalized intra adjacency on device from group labels ----
    lab_i = lab_col_ref[0]                           # (MAX_N, 1)
    lab_j = lab_row_ref[0]                           # (1, MAX_N)
    ri = lax.broadcasted_iota(jnp.int32, (max_n, max_n), 0)
    ci = lax.broadcasted_iota(jnp.int32, (max_n, max_n), 1)
    valid = (ri < n) & (ci < n)
    same = (lab_i == lab_j) & (lab_i != 0)
    m = jnp.where((same | (ri == ci)) & valid, 1.0, 0.0)          # (MAX_N, MAX_N) f32

    grp_size = jnp.sum(m, axis=1, keepdims=True)                  # |group(i)|, 0 for pad rows
    inv_size = jnp.where(grp_size > 0.0,
                         1.0 / jnp.maximum(grp_size, 1.0), 0.0)   # (MAX_N, 1)
    a_intra = m * inv_size                                        # normalize(M, dim=1); pad rows 0

    x = x_ref[0]                                                  # (MAX_N, INPUT_DIM)

    # ---- gcn_intra: H = relu(A @ H @ W), 2 layers ----
    h = jnp.dot(a_intra, x, preferred_element_type=F32)
    h = jnp.maximum(jnp.dot(h, wi0_ref[...], preferred_element_type=F32), 0.0)   # (MAX_N, HIDDEN)
    h = jnp.dot(h, wi1_ref[...], preferred_element_type=F32)      # re-associated: A @ (H @ W1)
    h_intra = jnp.maximum(jnp.dot(a_intra, h, preferred_element_type=F32), 0.0)  # (MAX_N, OUT_DIM)

    # ---- GPool + gcn_inter + GUnpool, using A_inter == 1/G (uniform) exactly ----
    # number of groups G = sum_i 1/|group(i)| (pad rows contribute 0)
    n_group = jnp.maximum(jnp.sum(inv_size, axis=0, keepdims=True), 1.0)          # (1,1)
    # mean over groups of the group-mean of h_intra  ==  A_inter @ (R @ h_intra) rows
    pooled = jnp.sum(h_intra * inv_size, axis=0, keepdims=True) / n_group         # (1, OUT_DIM)
    pooled8 = jnp.broadcast_to(pooled, (8, OUT_DIM))              # >=8 sublanes for the MXU
    u = jnp.maximum(jnp.dot(pooled8, we0_ref[...], preferred_element_type=F32), 0.0)
    v = jnp.maximum(jnp.dot(u, we1_ref[...], preferred_element_type=F32), 0.0)    # rows identical
    vb = jnp.dot(v, wb_ref[...], preferred_element_type=F32)[0:1, :]              # (1, FINAL_DIM)

    # ---- concat + out_embedding, split:  h_intra @ Wa + (R^T g_out) @ Wb + b
    #      where (R^T g_out)[i] = v / |group(i)|  ->  inv_size * vb
    out = (jnp.dot(h_intra, wa_ref[...], preferred_element_type=F32)
           + inv_size * vb + bout_ref[...])
    out_ref[0] = out        # padded rows hold garbage-free bias-only values; sliced off on host


def run_batched_kernel(nped, lab_col, lab_row, xp, params):
    S, max_n, _ = xp.shape
    wout = params["wout"]
    wa, wb = wout[:OUT_DIM], wout[OUT_DIM:]          # host-side split: no in-kernel concat

    def const(shape):                                # weight blocks: constant index_map
        return pl.BlockSpec(shape, lambda s, n_ref: (0,) * len(shape))

    grid_spec = pltpu.PrefetchScalarGridSpec(
        num_scalar_prefetch=1,                       # nped -> SMEM, visible to index_maps too
        grid=(S,),
        in_specs=[
            pl.BlockSpec((1, max_n, 1), lambda s, n_ref: (s, 0, 0)),          # labels (col)
            pl.BlockSpec((1, 1, max_n), lambda s, n_ref: (s, 0, 0)),          # labels (row)
            pl.BlockSpec((1, max_n, INPUT_DIM), lambda s, n_ref: (s, 0, 0)),  # X
            const((INPUT_DIM, HIDDEN_DIM)),          # wi0
            const((HIDDEN_DIM, OUT_DIM)),            # wi1
            const((OUT_DIM, HIDDEN_DIM)),            # we0
            const((HIDDEN_DIM, OUT_DIM)),            # we1
            const((OUT_DIM, FINAL_DIM)),             # wout[:16]
            const((OUT_DIM, FINAL_DIM)),             # wout[16:]
            const((1, FINAL_DIM)),                   # bias
        ],
        out_specs=pl.BlockSpec((1, max_n, FINAL_DIM), lambda s, n_ref: (s, 0, 0)),
    )
    return pl.pallas_call(
        gcn_module_kernel,
        grid_spec=grid_spec,
        out_shape=jax.ShapeDtypeStruct((S, max_n, FINAL_DIM), F32),
        compiler_params=pltpu.CompilerParams(dimension_semantics=("parallel",)),
    )(nped, lab_col, lab_row, xp,
      params["wi0"], params["wi1"], params["we0"], params["we1"],
      wa, wb, params["bout"])


# ---------------- host-side glue: pad / pack the ragged batch, unpack the result ----------------
def gcn_module_forward(h_states, seq_start_end, end_pos, end_group, params):
    """Matches GCNModule.forward. end_pos is accepted but unused (as in the reference)."""
    del end_pos
    hs = np.asarray(h_states, dtype=np.float32)
    eg = np.asarray(end_group).reshape(-1).astype(np.int32)
    S = len(seq_start_end)
    lens = np.array([int(e) - int(s) for (s, e) in seq_start_end], dtype=np.int32)
    max_n = max(8, int(-(-int(lens.max()) // 8) * 8))     # pad rows to a multiple of 8 sublanes

    xp = np.zeros((S, max_n, INPUT_DIM), dtype=np.float32)
    lab = np.zeros((S, max_n), dtype=np.int32)
    for i, (s, e) in enumerate(seq_start_end):
        n = int(e) - int(s)
        xp[i, :n] = hs[s:e]
        lab[i, :n] = eg[s:e]

    out = run_batched_kernel(jnp.asarray(lens),
                             jnp.asarray(lab.reshape(S, max_n, 1)),
                             jnp.asarray(lab.reshape(S, 1, max_n)),
                             jnp.asarray(xp), params)
    out = np.asarray(out)                                  # (S, MAX_N, FINAL_DIM)
    rows = [out[i, :int(lens[i])] for i in range(S)]       # drop padded rows
    return jnp.asarray(np.concatenate(rows, axis=0))       # (batch, FINAL_DIM)


# ---------------- pure-numpy reference (literal torch math) ----------------
def _row_normalize(m):
    m = m.astype(np.float32)
    return m / m.sum(axis=1, keepdims=True)


def _unique_rows_first_occurrence(m):
    _, idx = np.unique(m, axis=0, return_index=True)
    return m[np.sort(idx)]


def _ref_forward(h_states, seq_start_end, end_group, params):
    hs = np.asarray(h_states, np.float32)
    eg = np.asarray(end_group).reshape(-1, 1)
    wi0, wi1 = np.asarray(params["wi0"]), np.asarray(params["wi1"])
    we0, we1 = np.asarray(params["we0"]), np.asarray(params["we1"])
    wout, bout = np.asarray(params["wout"]), np.asarray(params["bout"])
    relu = lambda v: np.maximum(v, 0.0)
    rows = []
    for (s, e) in seq_start_end:
        n = e - s
        grp = eg[s:e]
        M = ((np.repeat(grp, n, 1) == np.repeat(grp.T, n, 0)) & (grp != 0)) | np.eye(n, dtype=bool)
        A_intra = _row_normalize(M)
        X = hs[s:e]
        h = relu(A_intra @ X @ wi0)
        h_intra = relu(A_intra @ h @ wi1)
        Ru = _unique_rows_first_occurrence(M)[::-1].copy()     # reversed-order cat, as in torch code
        R = _row_normalize(Ru)
        G = R.shape[0]
        A_inter = np.full((G, G), 1.0 / G, dtype=np.float32)
        g_in = R @ h_intra
        g = relu(A_inter @ g_in @ we0)
        g_out = relu(A_inter @ g @ we1)
        h_inter = R.T @ g_out
        cat = np.concatenate([h_intra, h_inter], axis=1)
        rows.append(cat @ wout + bout)
    return np.concatenate(rows, axis=0)


if __name__ == "__main__":
    key = jax.random.PRNGKey(0)
    ks = jax.random.split(key, 8)

    # Deterministic parameters (shapes from GCNModule.__init__); scaled for tame magnitudes.
    params = {
        "wi0": jax.random.normal(ks[0], (INPUT_DIM, HIDDEN_DIM), F32) * (1.0 / np.sqrt(INPUT_DIM)),
        "wi1": jax.random.normal(ks[1], (HIDDEN_DIM, OUT_DIM), F32) * (1.0 / np.sqrt(HIDDEN_DIM)),
        "we0": jax.random.normal(ks[2], (OUT_DIM, HIDDEN_DIM), F32) * (1.0 / np.sqrt(OUT_DIM)),
        "we1": jax.random.normal(ks[3], (HIDDEN_DIM, OUT_DIM), F32) * (1.0 / np.sqrt(HIDDEN_DIM)),
        # nn.Linear(out_dim*2, final_dim): y = x @ W.T + b; store in x@W layout directly.
        "wout": jax.random.normal(ks[4], (2 * OUT_DIM, FINAL_DIM), F32) * (1.0 / np.sqrt(2 * OUT_DIM)),
        "bout": jax.random.normal(ks[5], (1, FINAL_DIM), F32) * (1.0 / np.sqrt(2 * OUT_DIM)),
    }

    # Small deterministic example inputs.
    batch = 8
    h_states = jax.random.normal(ks[6], (batch, INPUT_DIM), F32)
    end_pos = jax.random.normal(ks[7], (batch, 2), F32)             # unused by forward
    end_group = np.array([1, 1, 0, 2, 2, 0, 3, 3], dtype=np.int64).reshape(batch, 1)
    seq_start_end = [(0, 3), (3, 8)]

    out = gcn_module_forward(h_states, seq_start_end, end_pos, end_group, params)
    out = jax.block_until_ready(out)
    assert out.shape == (batch, FINAL_DIM)

    ref = _ref_forward(np.asarray(h_states), seq_start_end, end_group, params)
    # tolerance covers f32 MXU multi-pass rounding / re-association across TPU generations
    np.testing.assert_allclose(np.asarray(out), ref, rtol=1e-3, atol=1e-3)

    print("KERNEL_OK")
</pallas_src>

<mosaic_0001>
module attributes {stable_mosaic.version = 11 : i64} {
  func.func @gcn_module_kernel(%arg0: i32, %arg1: memref<2xi32, #tpu.memory_space<smem>>, %arg2: memref<1x8x1xi32, #tpu.memory_space<vmem>>, %arg3: memref<1x1x8xi32, #tpu.memory_space<vmem>>, %arg4: memref<1x8x40xf32, #tpu.memory_space<vmem>>, %arg5: memref<40x72xf32, #tpu.memory_space<vmem>>, %arg6: memref<72x16xf32, #tpu.memory_space<vmem>>, %arg7: memref<16x72xf32, #tpu.memory_space<vmem>>, %arg8: memref<72x16xf32, #tpu.memory_space<vmem>>, %arg9: memref<16x24xf32, #tpu.memory_space<vmem>>, %arg10: memref<16x24xf32, #tpu.memory_space<vmem>>, %arg11: memref<1x24xf32, #tpu.memory_space<vmem>>, %arg12: memref<1x8x24xf32, #tpu.memory_space<vmem>>) attributes {dimension_semantics = [#tpu.dimension_semantics<parallel>], iteration_bounds = array<i64: 2>, scalar_prefetch = 1 : i64, scratch_operands = 0 : i64, tpu.core_type = #tpu.core_type<tc>, window_params = [{transform_indices = @transform_0, window_bounds = array<i64: 1, 8, 1>}, {transform_indices = @transform_1, window_bounds = array<i64: 1, 1, 8>}, {transform_indices = @transform_2, window_bounds = array<i64: 1, 8, 40>}, {pipeline_mode = #tpu.pipeline_mode<synchronous>, transform_indices = @transform_3, window_bounds = array<i64: 40, 72>}, {pipeline_mode = #tpu.pipeline_mode<synchronous>, transform_indices = @transform_4, window_bounds = array<i64: 72, 16>}, {pipeline_mode = #tpu.pipeline_mode<synchronous>, transform_indices = @transform_5, window_bounds = array<i64: 16, 72>}, {pipeline_mode = #tpu.pipeline_mode<synchronous>, transform_indices = @transform_6, window_bounds = array<i64: 72, 16>}, {pipeline_mode = #tpu.pipeline_mode<synchronous>, transform_indices = @transform_7, window_bounds = array<i64: 16, 24>}, {pipeline_mode = #tpu.pipeline_mode<synchronous>, transform_indices = @transform_8, window_bounds = array<i64: 16, 24>}, {pipeline_mode = #tpu.pipeline_mode<synchronous>, transform_indices = @transform_9, window_bounds = array<i64: 1, 24>}, {transform_indices = @transform_10, window_bounds = array<i64: 1, 8, 24>}]} {
    %0 = arith.index_cast %arg0 : i32 to index
    %1 = memref.load %arg1[%0] : memref<2xi32, #tpu.memory_space<smem>>
    %c0 = arith.constant 0 : index
    %c0_0 = arith.constant 0 : index
    %c0_1 = arith.constant 0 : index
    %2 = vector.load %arg2[%c0, %c0_0, %c0_1] : memref<1x8x1xi32, #tpu.memory_space<vmem>>, vector<1x8x1xi32>
    %3 = vector.shape_cast %2 : vector<1x8x1xi32> to vector<8x1xi32>
    %c0_2 = arith.constant 0 : index
    %c0_3 = arith.constant 0 : index
    %c0_4 = arith.constant 0 : index
    %4 = vector.load %arg3[%c0_2, %c0_3, %c0_4] : memref<1x1x8xi32, #tpu.memory_space<vmem>>, vector<1x1x8xi32>
    %5 = vector.shape_cast %4 : vector<1x1x8xi32> to vector<1x8xi32>
    %6 = tpu.iota {dimensions = array<i32: 0>} : vector<8x8xi32>
    %7 = tpu.iota {dimensions = array<i32: 1>} : vector<8x8xi32>
    %8 = vector.broadcast %1 : i32 to vector<8x8xi32>
    %9 = arith.cmpi slt, %6, %8 : vector<8x8xi32>
    %10 = vector.broadcast %1 : i32 to vector<8x8xi32>
    %11 = arith.cmpi slt, %7, %10 : vector<8x8xi32>
    %12 = arith.andi %9, %11 : vector<8x8xi1>
    %13 = vector.broadcast %3 : vector<8x1xi32> to vector<8x8xi32>
    %14 = vector.broadcast %5 : vector<1x8xi32> to vector<8x8xi32>
    %15 = arith.cmpi eq, %13, %14 : vector<8x8xi32>
    %c0_i32 = arith.constant 0 : i32
    %16 = vector.broadcast %c0_i32 : i32 to vector<8x1xi32>
    %17 = arith.cmpi ne, %3, %16 : vector<8x1xi32>
    %18 = vector.broadcast %17 : vector<8x1xi1> to vector<8x8xi1>
    %19 = arith.andi %15, %18 : vector<8x8xi1>
    %20 = arith.cmpi eq, %6, %7 : vector<8x8xi32>
    %21 = arith.ori %19, %20 : vector<8x8xi1>
    %22 = arith.andi %21, %12 : vector<8x8xi1>
    %cst = arith.constant 1.000000e+00 : f32
    %cst_5 = arith.constant 0.000000e+00 : f32
    %23 = vector.broadcast %cst : f32 to vector<8x8xf32>
    %24 = vector.broadcast %cst_5 : f32 to vector<8x8xf32>
    %25 = arith.select %22, %23, %24 : vector<8x8xi1>, vector<8x8xf32>
    %cst_6 = arith.constant dense<0.000000e+00> : vector<8xf32>
    %26 = vector.multi_reduction <add>, %25, %cst_6 [1] : vector<8x8xf32> to vector<8xf32>
    %27 = vector.shape_cast %26 : vector<8xf32> to vector<8x1xf32>
    %cst_7 = arith.constant 0.000000e+00 : f32
    %28 = vector.broadcast %cst_7 : f32 to vector<8x1xf32>
    %29 = arith.cmpf ogt, %27, %28 : vector<8x1xf32>
    %cst_8 = arith.constant 1.000000e+00 : f32
    %30 = vector.broadcast %cst_8 : f32 to vector<8x1xf32>
    %31 = arith.maximumf %27, %30 : vector<8x1xf32>
    %cst_9 = arith.constant 1.000000e+00 : f32
    %32 = vector.broadcast %cst_9 : f32 to vector<8x1xf32>
    %33 = arith.divf %32, %31 : vector<8x1xf32>
    %cst_10 = arith.constant 0.000000e+00 : f32
    %34 = vector.broadcast %cst_10 : f32 to vector<8x1xf32>
    %35 = arith.select %29, %33, %34 : vector<8x1xi1>, vector<8x1xf32>
    %36 = vector.broadcast %35 : vector<8x1xf32> to vector<8x8xf32>
    %37 = arith.mulf %25, %36 : vector<8x8xf32>
    %c0_11 = arith.constant 0 : index
    %c0_12 = arith.constant 0 : index
    %c0_13 = arith.constant 0 : index
    %38 = vector.load %arg4[%c0_11, %c0_12, %c0_13] : memref<1x8x40xf32, #tpu.memory_space<vmem>>, vector<1x8x40xf32>
    %39 = vector.shape_cast %38 : vector<1x8x40xf32> to vector<8x40xf32>
    %cst_14 = arith.constant dense<0.000000e+00> : vector<8x40xf32>
    %40 = tpu.matmul %37, %39, %cst_14 {dimension_numbers = #tpu.dot_dimension_numbers<[1], [0], [0], [1], [0, 0, 1, 1], [], []>} : vector<8x8xf32>, vector<8x40xf32>, vector<8x40xf32> -> vector<8x40xf32>
    %c0_15 = arith.constant 0 : index
    %c0_16 = arith.constant 0 : index
    %41 = vector.load %arg5[%c0_15, %c0_16] : memref<40x72xf32, #tpu.memory_space<vmem>>, vector<40x72xf32>
    %cst_17 = arith.constant dense<0.000000e+00> : vector<8x72xf32>
    %42 = tpu.matmul %40, %41, %cst_17 {dimension_numbers = #tpu.dot_dimension_numbers<[1], [0], [0], [1], [0, 0, 1, 1], [], []>} : vector<8x40xf32>, vector<40x72xf32>, vector<8x72xf32> -> vector<8x72xf32>
    %cst_18 = arith.constant 0.000000e+00 : f32
    %43 = vector.broadcast %cst_18 : f32 to vector<8x72xf32>
    %44 = arith.maximumf %42, %43 : vector<8x72xf32>
    %c0_19 = arith.constant 0 : index
    %c0_20 = arith.constant 0 : index
    %45 = vector.load %arg6[%c0_19, %c0_20] : memref<72x16xf32, #tpu.memory_space<vmem>>, vector<72x16xf32>
    %cst_21 = arith.constant dense<0.000000e+00> : vector<8x16xf32>
    %46 = tpu.matmul %44, %45, %cst_21 {dimension_numbers = #tpu.dot_dimension_numbers<[1], [0], [0], [1], [0, 0, 1, 1], [], []>} : vector<8x72xf32>, vector<72x16xf32>, vector<8x16xf32> -> vector<8x16xf32>
    %cst_22 = arith.constant dense<0.000000e+00> : vector<8x16xf32>
    %47 = tpu.matmul %37, %46, %cst_22 {dimension_numbers = #tpu.dot_dimension_numbers<[1], [0], [0], [1], [0, 0, 1, 1], [], []>} : vector<8x8xf32>, vector<8x16xf32>, vector<8x16xf32> -> vector<8x16xf32>
    %cst_23 = arith.constant 0.000000e+00 : f32
    %48 = vector.broadcast %cst_23 : f32 to vector<8x16xf32>
    %49 = arith.maximumf %47, %48 : vector<8x16xf32>
    %cst_24 = arith.constant dense<0.000000e+00> : vector<1xf32>
    %50 = vector.multi_reduction <add>, %35, %cst_24 [0] : vector<8x1xf32> to vector<1xf32>
    %51 = vector.shape_cast %50 : vector<1xf32> to vector<1x1xf32>
    %cst_25 = arith.constant 1.000000e+00 : f32
    %52 = vector.broadcast %cst_25 : f32 to vector<1x1xf32>
    %53 = arith.maximumf %51, %52 : vector<1x1xf32>
    %54 = vector.broadcast %35 : vector<8x1xf32> to vector<8x16xf32>
    %55 = arith.mulf %49, %54 : vector<8x16xf32>
    %cst_26 = arith.constant dense<0.000000e+00> : vector<16xf32>
    %56 = vector.multi_reduction <add>, %55, %cst_26 [0] : vector<8x16xf32> to vector<16xf32>
    %57 = vector.shape_cast %56 : vector<16xf32> to vector<1x16xf32>
    %58 = vector.broadcast %53 : vector<1x1xf32> to vector<1x16xf32>
    %59 = arith.divf %57, %58 : vector<1x16xf32>
    %60 = vector.shape_cast %59 : vector<1x16xf32> to vector<1x16xf32>
    %61 = vector.broadcast %60 : vector<1x16xf32> to vector<8x16xf32>
    %c0_27 = arith.constant 0 : index
    %c0_28 = arith.constant 0 : index
    %62 = vector.load %arg7[%c0_27, %c0_28] : memref<16x72xf32, #tpu.memory_space<vmem>>, vector<16x72xf32>
    %cst_29 = arith.constant dense<0.000000e+00> : vector<8x72xf32>
    %63 = tpu.matmul %61, %62, %cst_29 {dimension_numbers = #tpu.dot_dimension_numbers<[1], [0], [0], [1], [0, 0, 1, 1], [], []>} : vector<8x16xf32>, vector<16x72xf32>, vector<8x72xf32> -> vector<8x72xf32>
    %cst_30 = arith.constant 0.000000e+00 : f32
    %64 = vector.broadcast %cst_30 : f32 to vector<8x72xf32>
    %65 = arith.maximumf %63, %64 : vector<8x72xf32>
    %c0_31 = arith.constant 0 : index
    %c0_32 = arith.constant 0 : index
    %66 = vector.load %arg8[%c0_31, %c0_32] : memref<72x16xf32, #tpu.memory_space<vmem>>, vector<72x16xf32>
    %cst_33 = arith.constant dense<0.000000e+00> : vector<8x16xf32>
    %67 = tpu.matmul %65, %66, %cst_33 {dimension_numbers = #tpu.dot_dimension_numbers<[1], [0], [0], [1], [0, 0, 1, 1], [], []>} : vector<8x72xf32>, vector<72x16xf32>, vector<8x16xf32> -> vector<8x16xf32>
    %cst_34 = arith.constant 0.000000e+00 : f32
    %68 = vector.broadcast %cst_34 : f32 to vector<8x16xf32>
    %69 = arith.maximumf %67, %68 : vector<8x16xf32>
    %c0_35 = arith.constant 0 : index
    %c0_36 = arith.constant 0 : index
    %70 = vector.load %arg10[%c0_35, %c0_36] : memref<16x24xf32, #tpu.memory_space<vmem>>, vector<16x24xf32>
    %cst_37 = arith.constant dense<0.000000e+00> : vector<8x24xf32>
    %71 = tpu.matmul %69, %70, %cst_37 {dimension_numbers = #tpu.dot_dimension_numbers<[1], [0], [0], [1], [0, 0, 1, 1], [], []>} : vector<8x16xf32>, vector<16x24xf32>, vector<8x24xf32> -> vector<8x24xf32>
    %72 = vector.extract_strided_slice %71 {offsets = [0, 0], sizes = [1, 24], strides = [1, 1]} : vector<8x24xf32> to vector<1x24xf32>
    %c0_38 = arith.constant 0 : index
    %c0_39 = arith.constant 0 : index
    %73 = vector.load %arg9[%c0_38, %c0_39] : memref<16x24xf32, #tpu.memory_space<vmem>>, vector<16x24xf32>
    %cst_40 = arith.constant dense<0.000000e+00> : vector<8x24xf32>
    %74 = tpu.matmul %49, %73, %cst_40 {dimension_numbers = #tpu.dot_dimension_numbers<[1], [0], [0], [1], [0, 0, 1, 1], [], []>} : vector<8x16xf32>, vector<16x24xf32>, vector<8x24xf32> -> vector<8x24xf32>
    %75 = vector.broadcast %35 : vector<8x1xf32> to vector<8x24xf32>
    %76 = vector.broadcast %72 : vector<1x24xf32> to vector<8x24xf32>
    %77 = arith.mulf %75, %76 : vector<8x24xf32>
    %78 = arith.addf %74, %77 : vector<8x24xf32>
    %c0_41 = arith.constant 0 : index
    %c0_42 = arith.constant 0 : index
    %79 = vector.load %arg11[%c0_41, %c0_42] : memref<1x24xf32, #tpu.memory_space<vmem>>, vector<1x24xf32>
    %80 = vector.broadcast %79 : vector<1x24xf32> to vector<8x24xf32>
    %81 = arith.addf %78, %80 : vector<8x24xf32>
    %c0_43 = arith.constant 0 : index
    %c0_44 = arith.constant 0 : index
    %c0_45 = arith.constant 0 : index
    %82 = vector.load %arg12[%c0_43, %c0_44, %c0_45] : memref<1x8x24xf32, #tpu.memory_space<vmem>>, vector<1x8x24xf32>
    %83 = vector.shape_cast %82 : vector<1x8x24xf32> to vector<8x24xf32>
    %84 = vector.shape_cast %81 : vector<8x24xf32> to vector<1x8x24xf32>
    tpu.vector_store %arg12[%c0_43, %c0_44, %c0_45], %84 {strides = array<i32>} : memref<1x8x24xf32, #tpu.memory_space<vmem>>, vector<1x8x24xf32>,
    return
  }
  func.func @transform_0(%arg0: i32, %arg1: memref<2xi32, #tpu.memory_space<smem>>) -> (i32, i32, i32) {
    %c0_i32 = arith.constant 0 : i32
    %c0_i32_0 = arith.constant 0 : i32
    %c0_i32_1 = arith.constant 0 : i32
    return %arg0, %c0_i32, %c0_i32_0 : i32, i32, i32
  }
  func.func @transform_1(%arg0: i32, %arg1: memref<2xi32, #tpu.memory_space<smem>>) -> (i32, i32, i32) {
    %c0_i32 = arith.constant 0 : i32
    %c0_i32_0 = arith.constant 0 : i32
    %c0_i32_1 = arith.constant 0 : i32
    return %arg0, %c0_i32, %c0_i32_0 : i32, i32, i32
  }
  func.func @transform_2(%arg0: i32, %arg1: memref<2xi32, #tpu.memory_space<smem>>) -> (i32, i32, i32) {
    %c0_i32 = arith.constant 0 : i32
    %c0_i32_0 = arith.constant 0 : i32
    %c0_i32_1 = arith.constant 0 : i32
    return %arg0, %c0_i32, %c0_i32_0 : i32, i32, i32
  }
  func.func @transform_3(%arg0: i32, %arg1: memref<2xi32, #tpu.memory_space<smem>>) -> (i32, i32) {
    %c0_i32 = arith.constant 0 : i32
    %c0_i32_0 = arith.constant 0 : i32
    %c0_i32_1 = arith.constant 0 : i32
    return %c0_i32, %c0_i32_0 : i32, i32
  }
  func.func @transform_4(%arg0: i32, %arg1: memref<2xi32, #tpu.memory_space<smem>>) -> (i32, i32) {
    %c0_i32 = arith.constant 0 : i32
    %c0_i32_0 = arith.constant 0 : i32
    %c0_i32_1 = arith.constant 0 : i32
    return %c0_i32, %c0_i32_0 : i32, i32
  }
  func.func @transform_5(%arg0: i32, %arg1: memref<2xi32, #tpu.memory_space<smem>>) -> (i32, i32) {
    %c0_i32 = arith.constant 0 : i32
    %c0_i32_0 = arith.constant 0 : i32
    %c0_i32_1 = arith.constant 0 : i32
    return %c0_i32, %c0_i32_0 : i32, i32
  }
  func.func @transform_6(%arg0: i32, %arg1: memref<2xi32, #tpu.memory_space<smem>>) -> (i32, i32) {
    %c0_i32 = arith.constant 0 : i32
    %c0_i32_0 = arith.constant 0 : i32
    %c0_i32_1 = arith.constant 0 : i32
    return %c0_i32, %c0_i32_0 : i32, i32
  }
  func.func @transform_7(%arg0: i32, %arg1: memref<2xi32, #tpu.memory_space<smem>>) -> (i32, i32) {
    %c0_i32 = arith.constant 0 : i32
    %c0_i32_0 = arith.constant 0 : i32
    %c0_i32_1 = arith.constant 0 : i32
    return %c0_i32, %c0_i32_0 : i32, i32
  }
  func.func @transform_8(%arg0: i32, %arg1: memref<2xi32, #tpu.memory_space<smem>>) -> (i32, i32) {
    %c0_i32 = arith.constant 0 : i32
    %c0_i32_0 = arith.constant 0 : i32
    %c0_i32_1 = arith.constant 0 : i32
    return %c0_i32, %c0_i32_0 : i32, i32
  }
  func.func @transform_9(%arg0: i32, %arg1: memref<2xi32, #tpu.memory_space<smem>>) -> (i32, i32) {
    %c0_i32 = arith.constant 0 : i32
    %c0_i32_0 = arith.constant 0 : i32
    %c0_i32_1 = arith.constant 0 : i32
    return %c0_i32, %c0_i32_0 : i32, i32
  }
  func.func @transform_10(%arg0: i32, %arg1: memref<2xi32, #tpu.memory_space<smem>>) -> (i32, i32, i32) {
    %c0_i32 = arith.constant 0 : i32
    %c0_i32_0 = arith.constant 0 : i32
    %c0_i32_1 = arith.constant 0 : i32
    return %arg0, %c0_i32, %c0_i32_0 : i32, i32, i32
  }
}

</mosaic_0001>

<llo_original>
// kernel: tpu_custom_call.1
$region0: #{tpu_custom_call.1}
  #allocation0 [shape = 'u32[]', space=smem, size = 0x4, offset = 0x4, fixed_abs, tag = 'smem constant byte address 0x4 - core index']
  #allocation1 [shape = 'u32[144,128]{1,0:T(1,128)}', space=vmem, size = 0x12000, scoped, tag = 'internal scratch']
  #allocation2 [shape = 's32[1]{0}', space=sflag, size = 0x4, scoped, tag = 'scoped memory for tpu_custom_call.1']
  #allocation3 [shape = 'u8[512]{0}', space=smem, size = 0x200, scoped, tag = 'prefetched SMEM operand 0']
  %s0 = inlined_call_operand.vmem [shape: s32[2], index: 0, kind: input, shape index: {}]
  %s1 = inlined_call_operand.vmem [shape: s32[2,8,1], index: 1, kind: input, shape index: {}]
  %s2 = inlined_call_operand.vmem [shape: s32[2,1,8], index: 2, kind: input, shape index: {}]
  %s3 = inlined_call_operand.vmem [shape: f32[2,8,40], index: 3, kind: input, shape index: {}]
  %s4 = inlined_call_operand.vmem [shape: f32[40,72], index: 4, kind: input, shape index: {}]
  %s5 = inlined_call_operand.vmem [shape: f32[72,16], index: 5, kind: input, shape index: {}]
  %s6 = inlined_call_operand.vmem [shape: f32[16,72], index: 6, kind: input, shape index: {}]
  %s7 = inlined_call_operand.vmem [shape: f32[72,16], index: 7, kind: input, shape index: {}]
  %s8 = inlined_call_operand.vmem [shape: f32[16,24], index: 8, kind: input, shape index: {}]
  %s9 = inlined_call_operand.vmem [shape: f32[16,24], index: 9, kind: input, shape index: {}]
  %s10 = inlined_call_operand.vmem [shape: f32[1,24], index: 10, kind: input, shape index: {}]
  %s11 = inlined_call_operand.hbm [shape: f32[2,8,24], index: 11, kind: output, shape index: {}]
  %s12 = sld [smem:[#allocation0]]
  $region73: #{tpu_custom_call.1} parent=0
    _
  %s14 = ssub.s32 1, %s12
  %s15 = scalar_select 0, %s14, %s12
  %s16 = sshll.u32 %s0, 4
  %s17 = int_to_ptr.vmem [resolvable:$true] %s16
  %19 = dma.vmem_to_smem %s17, 16, [#allocation3], [#allocation2]
  %20 = dma.done [#allocation2], 16
  %21 = sfence
  $region1: #{tpu_custom_call.1} parent=0
    #allocation4 [shape = 'u8[8192]{0}', space=vmem, size = 0x2000, scoped, tag = 'output window, operand 0']
    #allocation5 [shape = 's32[2]{0}', space=sflag, size = 0x8, scoped, tag = 'scoped memory for tpu_custom_call.1']
    %22 = vsyncpa [#allocation5], 0
    %s23 = scalar_lea.sflag [#allocation5], 1
    %24 = vsyncpa %s23, 0
    loop: start=0, step=1, limit=4
    $region2: #{tpu_custom_call.1} parent=1 // loop_pre_header
      _
    $region3: #{tpu_custom_call.1} parent=1 // loop_header
      %s26 = sphi 0, %s30
      %p27 = scmp.ge.s32.totalorder %s26, 4
      %s36 = sphi 0, %s38
      %s39 = sphi 0, %s36
      %s40 = sphi 0, %s39
      %s56 = sphi 0, %s40
      %s62 = sphi 0, %s64
      %s65 = sphi 0, %s62
      %s66 = sphi 0, %s65
      %s82 = sphi 0, %s66
      %s88 = sphi 0, %s90
      %s91 = sphi 0, %s88
      %s92 = sphi 0, %s91
      %s108 = sphi 0, %s92
      %s112 = sphi 0, %s112
      %s114 = sphi 0, %s112
      %s115 = sphi 0, %s114
      %s129 = sphi 0, %s115
      %s133 = sphi 0, %s133
      %s135 = sphi 0, %s133
      %s136 = sphi 0, %s135
      %s150 = sphi 0, %s136
      %s154 = sphi 0, %s154
      %s156 = sphi 0, %s154
      %s157 = sphi 0, %s156
      %s171 = sphi 0, %s157
      %s175 = sphi 0, %s175
      %s177 = sphi 0, %s175
      %s178 = sphi 0, %s177
      %s192 = sphi 0, %s178
      %s196 = sphi 0, %s196
      %s198 = sphi 0, %s196
      %s199 = sphi 0, %s198
      %s213 = sphi 0, %s199
      %s217 = sphi 0, %s217
      %s219 = sphi 0, %s217
      %s220 = sphi 0, %s219
      %s234 = sphi 0, %s220
      %s238 = sphi 0, %s238
      %s240 = sphi 0, %s238
      %s241 = sphi 0, %s240
      %s255 = sphi 0, %s241
      %s261 = sphi 0, %s263
      %s264 = sphi 0, %s261
      %s265 = sphi 0, %s264
      %s281 = sphi 0, %s265
    $region4: #{tpu_custom_call.1} parent=1 // loop_header_branch
      %29 = sbr.rel (%p27) target = $region8
    $region5: #{tpu_custom_call.1} parent=1 // loop_body
      %s31 = ssub.s32 %s26, 1
      %s32 = ssub.s32 %s26, 2
      %s33 = sadd.s32 %s26, 1
      %s34 = ssub.s32 %s26, %s33
      %p35 = scmp.eq.s32.totalorder %s34, 0
      %s37 = sadd.s32 %s36, 1
      %s38 = scalar_select %p35, %s36, %s37
      %p41 = pneg %p35
      %p42 = scmp.eq.s32.totalorder %s26, 1
      %p43 = por %p41, %p42
      %p44 = scmp.ne.s32.totalorder %s36, %s39
      %p45 = scmp.eq.s32.totalorder %s26, 0
      %p46 = por %p44, %p45
      %p47 = scmp.ne.s32.totalorder %s36, %s39
      %p48 = scmp.eq.s32.totalorder %s31, 1
      %p49 = por %p47, %p48
      %p50 = scmp.ne.s32.totalorder %s39, %s40
      %p51 = scmp.eq.s32.totalorder %s31, 0
      %p52 = por %p50, %p51
      %p53 = scmp.ne.s32.totalorder %s39, %s40
      %p54 = scmp.eq.s32.totalorder %s32, 1
      %p55 = por %p53, %p54
      %p57 = scmp.ne.s32.totalorder %s40, %s56
      %p58 = scmp.eq.s32.totalorder %s32, 0
      %p59 = por %p57, %p58
      %s60 = ssub.s32 %s26, %s33
      %p61 = scmp.eq.s32.totalorder %s60, 0
      %s63 = sadd.s32 %s62, 1
      %s64 = scalar_select %p61, %s62, %s63
      %p67 = pneg %p61
      %p68 = scmp.eq.s32.totalorder %s26, 1
      %p69 = por %p67, %p68
      %p70 = scmp.ne.s32.totalorder %s62, %s65
      %p71 = scmp.eq.s32.totalorder %s26, 0
      %p72 = por %p70, %p71
      %p73 = scmp.ne.s32.totalorder %s62, %s65
      %p74 = scmp.eq.s32.totalorder %s31, 1
      %p75 = por %p73, %p74
      %p76 = scmp.ne.s32.totalorder %s65, %s66
      %p77 = scmp.eq.s32.totalorder %s31, 0
      %p78 = por %p76, %p77
      %p79 = scmp.ne.s32.totalorder %s65, %s66
      %p80 = scmp.eq.s32.totalorder %s32, 1
      %p81 = por %p79, %p80
      %p83 = scmp.ne.s32.totalorder %s66, %s82
      %p84 = scmp.eq.s32.totalorder %s32, 0
      %p85 = por %p83, %p84
      %s86 = ssub.s32 %s26, %s33
      %p87 = scmp.eq.s32.totalorder %s86, 0
      %s89 = sadd.s32 %s88, 1
      %s90 = scalar_select %p87, %s88, %s89
      %p93 = pneg %p87
      %p94 = scmp.eq.s32.totalorder %s26, 1
      %p95 = por %p93, %p94
      %p96 = scmp.ne.s32.totalorder %s88, %s91
      %p97 = scmp.eq.s32.totalorder %s26, 0
      %p98 = por %p96, %p97
      %p99 = scmp.ne.s32.totalorder %s88, %s91
      %p100 = scmp.eq.s32.totalorder %s31, 1
      %p101 = por %p99, %p100
      %p102 = scmp.ne.s32.totalorder %s91, %s92
      %p103 = scmp.eq.s32.totalorder %s31, 0
      %p104 = por %p102, %p103
      %p105 = scmp.ne.s32.totalorder %s91, %s92
      %p106 = scmp.eq.s32.totalorder %s32, 1
      %p107 = por %p105, %p106
      %p109 = scmp.ne.s32.totalorder %s92, %s108
      %p110 = scmp.eq.s32.totalorder %s32, 0
      %p111 = por %p109, %p110
      %s113 = sadd.s32 %s112, 1
      %p116 = scmp.eq.s32.totalorder %s26, 1
      %p117 = scmp.ne.s32.totalorder %s112, %s114
      %p118 = scmp.eq.s32.totalorder %s26, 0
      %p119 = por %p117, %p118
      %p120 = scmp.ne.s32.totalorder %s112, %s114
      %p121 = scmp.eq.s32.totalorder %s31, 1
      %p122 = por %p120, %p121
      %p123 = scmp.ne.s32.totalorder %s114, %s115
      %p124 = scmp.eq.s32.totalorder %s31, 0
      %p125 = por %p123, %p124
      %p126 = scmp.ne.s32.totalorder %s114, %s115
      %p127 = scmp.eq.s32.totalorder %s32, 1
      %p128 = por %p126, %p127
      %p130 = scmp.ne.s32.totalorder %s115, %s129
      %p131 = scmp.eq.s32.totalorder %s32, 0
      %p132 = por %p130, %p131
      %s134 = sadd.s32 %s133, 1
      %p137 = scmp.eq.s32.totalorder %s26, 1
      %p138 = scmp.ne.s32.totalorder %s133, %s135
      %p139 = scmp.eq.s32.totalorder %s26, 0
      %p140 = por %p138, %p139
      %p141 = scmp.ne.s32.totalorder %s133, %s135
      %p142 = scmp.eq.s32.totalorder %s31, 1
      %p143 = por %p141, %p142
      %p144 = scmp.ne.s32.totalorder %s135, %s136
      %p145 = scmp.eq.s32.totalorder %s31, 0
      %p146 = por %p144, %p145
      %p147 = scmp.ne.s32.totalorder %s135, %s136
      %p148 = scmp.eq.s32.totalorder %s32, 1
      %p149 = por %p147, %p148
      %p151 = scmp.ne.s32.totalorder %s136, %s150
      %p152 = scmp.eq.s32.totalorder %s32, 0
      %p153 = por %p151, %p152
      %s155 = sadd.s32 %s154, 1
      %p158 = scmp.eq.s32.totalorder %s26, 1
      %p159 = scmp.ne.s32.totalorder %s154, %s156
      %p160 = scmp.eq.s32.totalorder %s26, 0
      %p161 = por %p159, %p160
      %p162 = scmp.ne.s32.totalorder %s154, %s156
      %p163 = scmp.eq.s32.totalorder %s31, 1
      %p164 = por %p162, %p163
      %p165 = scmp.ne.s32.totalorder %s156, %s157
      %p166 = scmp.eq.s32.totalorder %s31, 0
      %p167 = por %p165, %p166
      %p168 = scmp.ne.s32.totalorder %s156, %s157
      %p169 = scmp.eq.s32.totalorder %s32, 1
      %p170 = por %p168, %p169
      %p172 = scmp.ne.s32.totalorder %s157, %s171
      %p173 = scmp.eq.s32.totalorder %s32, 0
      %p174 = por %p172, %p173
      %s176 = sadd.s32 %s175, 1
      %p179 = scmp.eq.s32.totalorder %s26, 1
      %p180 = scmp.ne.s32.totalorder %s175, %s177
      %p181 = scmp.eq.s32.totalorder %s26, 0
      %p182 = por %p180, %p181
      %p183 = scmp.ne.s32.totalorder %s175, %s177
      %p184 = scmp.eq.s32.totalorder %s31, 1
      %p185 = por %p183, %p184
      %p186 = scmp.ne.s32.totalorder %s177, %s178
      %p187 = scmp.eq.s32.totalorder %s31, 0
      %p188 = por %p186, %p187
      %p189 = scmp.ne.s32.totalorder %s177, %s178
      %p190 = scmp.eq.s32.totalorder %s32, 1
      %p191 = por %p189, %p190
      %p193 = scmp.ne.s32.totalorder %s178, %s192
      %p194 = scmp.eq.s32.totalorder %s32, 0
      %p195 = por %p193, %p194
      %s197 = sadd.s32 %s196, 1
      %p200 = scmp.eq.s32.totalorder %s26, 1
      %p201 = scmp.ne.s32.totalorder %s196, %s198
      %p202 = scmp.eq.s32.totalorder %s26, 0
      %p203 = por %p201, %p202
      %p204 = scmp.ne.s32.totalorder %s196, %s198
      %p205 = scmp.eq.s32.totalorder %s31, 1
      %p206 = por %p204, %p205
      %p207 = scmp.ne.s32.totalorder %s198, %s199
      %p208 = scmp.eq.s32.totalorder %s31, 0
      %p209 = por %p207, %p208
      %p210 = scmp.ne.s32.totalorder %s198, %s199
      %p211 = scmp.eq.s32.totalorder %s32, 1
      %p212 = por %p210, %p211
      %p214 = scmp.ne.s32.totalorder %s199, %s213
      %p215 = scmp.eq.s32.totalorder %s32, 0
      %p216 = por %p214, %p215
      %s218 = sadd.s32 %s217, 1
      %p221 = scmp.eq.s32.totalorder %s26, 1
      %p222 = scmp.ne.s32.totalorder %s217, %s219
      %p223 = scmp.eq.s32.totalorder %s26, 0
      %p224 = por %p222, %p223
      %p225 = scmp.ne.s32.totalorder %s217, %s219
      %p226 = scmp.eq.s32.totalorder %s31, 1
      %p227 = por %p225, %p226
      %p228 = scmp.ne.s32.totalorder %s219, %s220
      %p229 = scmp.eq.s32.totalorder %s31, 0
      %p230 = por %p228, %p229
      %p231 = scmp.ne.s32.totalorder %s219, %s220
      %p232 = scmp.eq.s32.totalorder %s32, 1
      %p233 = por %p231, %p232
      %p235 = scmp.ne.s32.totalorder %s220, %s234
      %p236 = scmp.eq.s32.totalorder %s32, 0
      %p237 = por %p235, %p236
      %s239 = sadd.s32 %s238, 1
      %p242 = scmp.eq.s32.totalorder %s26, 1
      %p243 = scmp.ne.s32.totalorder %s238, %s240
      %p244 = scmp.eq.s32.totalorder %s26, 0
      %p245 = por %p243, %p244
      %p246 = scmp.ne.s32.totalorder %s238, %s240
      %p247 = scmp.eq.s32.totalorder %s31, 1
      %p248 = por %p246, %p247
      %p249 = scmp.ne.s32.totalorder %s240, %s241
      %p250 = scmp.eq.s32.totalorder %s31, 0
      %p251 = por %p249, %p250
      %p252 = scmp.ne.s32.totalorder %s240, %s241
      %p253 = scmp.eq.s32.totalorder %s32, 1
      %p254 = por %p252, %p253
      %p256 = scmp.ne.s32.totalorder %s241, %s255
      %p257 = scmp.eq.s32.totalorder %s32, 0
      %p258 = por %p256, %p257
      %s259 = ssub.s32 %s26, %s33
      %p260 = scmp.eq.s32.totalorder %s259, 0
      %s262 = sadd.s32 %s261, 1
      %s263 = scalar_select %p260, %s261, %s262
      %p266 = pneg %p260
      %p267 = scmp.eq.s32.totalorder %s26, 1
      %p268 = por %p266, %p267
      %p269 = scmp.ne.s32.totalorder %s261, %s264
      %p270 = scmp.eq.s32.totalorder %s26, 0
      %p271 = por %p269, %p270
      %p272 = scmp.ne.s32.totalorder %s261, %s264
      %p273 = scmp.eq.s32.totalorder %s31, 1
      %p274 = por %p272, %p273
      %p275 = scmp.ne.s32.totalorder %s264, %s265
      %p276 = scmp.eq.s32.totalorder %s31, 0
      %p277 = por %p275, %p276
      %p278 = scmp.ne.s32.totalorder %s264, %s265
      %p279 = scmp.eq.s32.totalorder %s32, 1
      %p280 = por %p278, %p279
      %p282 = scmp.ne.s32.totalorder %s265, %s281
      %p283 = scmp.eq.s32.totalorder %s32, 0
      %p284 = por %p282, %p283
      %p285 = scmp.le.s32.totalorder 1, %s26
      %p286 = scmp.lt.s32.totalorder %s26, 3
      %p287 = pnand %p285, %p286
      %p288 = pneg %p287
      // Predicated region
      $region9: #{tpu_custom_call.1} parent=5 // pred_check
        _
      $region10: #{tpu_custom_call.1} parent=5 // pred_check_branch
        %290 = sbr.rel (%p287) target = $region12
      $region11: #{tpu_custom_call.1} parent=5 // pred_region
        %s291 = ssub.s32 %s26, 1
        // Predicated region
        $region13: #{tpu_custom_call.1} parent=11 // pred_check
          %p292 = pneg %p125
        $region14: #{tpu_custom_call.1} parent=11 // pred_check_branch
          %294 = sbr.rel (%p292) target = $region16
        $region15: #{tpu_custom_call.1} parent=11 // pred_region
          _
        $region16: #{tpu_custom_call.1} parent=11 // pred_fallthru
          _
        // Predicated region
        $region17: #{tpu_custom_call.1} parent=11 // pred_check
          %p295 = pneg %p146
        $region18: #{tpu_custom_call.1} parent=11 // pred_check_branch
          %297 = sbr.rel (%p295) target = $region20
        $region19: #{tpu_custom_call.1} parent=11 // pred_region
          _
        $region20: #{tpu_custom_call.1} parent=11 // pred_fallthru
          _
        // Predicated region
        $region21: #{tpu_custom_call.1} parent=11 // pred_check
          %p298 = pneg %p167
        $region22: #{tpu_custom_call.1} parent=11 // pred_check_branch
          %300 = sbr.rel (%p298) target = $region24
        $region23: #{tpu_custom_call.1} parent=11 // pred_region
          _
        $region24: #{tpu_custom_call.1} parent=11 // pred_fallthru
          _
        // Predicated region
        $region25: #{tpu_custom_call.1} parent=11 // pred_check
          %p301 = pneg %p188
        $region26: #{tpu_custom_call.1} parent=11 // pred_check_branch
          %303 = sbr.rel (%p301) target = $region28
        $region27: #{tpu_custom_call.1} parent=11 // pred_region
          _
        $region28: #{tpu_custom_call.1} parent=11 // pred_fallthru
          _
        // Predicated region
        $region29: #{tpu_custom_call.1} parent=11 // pred_check
          %p304 = pneg %p209
        $region30: #{tpu_custom_call.1} parent=11 // pred_check_branch
          %306 = sbr.rel (%p304) target = $region32
        $region31: #{tpu_custom_call.1} parent=11 // pred_region
          _
        $region32: #{tpu_custom_call.1} parent=11 // pred_fallthru
          _
        // Predicated region
        $region33: #{tpu_custom_call.1} parent=11 // pred_check
          %p307 = pneg %p230
        $region34: #{tpu_custom_call.1} parent=11 // pred_check_branch
          %309 = sbr.rel (%p307) target = $region36
        $region35: #{tpu_custom_call.1} parent=11 // pred_region
          _
        $region36: #{tpu_custom_call.1} parent=11 // pred_fallthru
          _
        // Predicated region
        $region37: #{tpu_custom_call.1} parent=11 // pred_check
          %p310 = pneg %p251
        $region38: #{tpu_custom_call.1} parent=11 // pred_check_branch
          %312 = sbr.rel (%p310) target = $region40
        $region39: #{tpu_custom_call.1} parent=11 // pred_region
          _
        $region40: #{tpu_custom_call.1} parent=11 // pred_fallthru
          _
      $region12: #{tpu_custom_call.1} parent=5 // pred_fallthru
        _
      %p313 = scmp.lt.s32.totalorder %s26, 2
      // Predicated region
      $region41: #{tpu_custom_call.1} parent=5 // pred_check
        %p314 = pneg %p313
      $region42: #{tpu_custom_call.1} parent=5 // pred_check_branch
        %316 = sbr.rel (%p314) target = $region44
      $region43: #{tpu_custom_call.1} parent=5 // pred_region
        // Predicated region
        $region45: #{tpu_custom_call.1} parent=43 // pred_check
          %p317 = pneg %p46
        $region46: #{tpu_custom_call.1} parent=43 // pred_check_branch
          %319 = sbr.rel (%p317) target = $region48
        $region47: #{tpu_custom_call.1} parent=43 // pred_region
          %p320 = scmp.lt.s32.totalorder %s26, 1
          %s321 = scalar_select %p320, %s26, 1
          %s322 = smul.addr %s321, 8
          %s323 = scalar_lea.vmem %s1, %s322
        $region48: #{tpu_custom_call.1} parent=43 // pred_fallthru
          _
        // Predicated region
        $region49: #{tpu_custom_call.1} parent=43 // pred_check
          %p324 = pneg %p72
        $region50: #{tpu_custom_call.1} parent=43 // pred_check_branch
          %326 = sbr.rel (%p324) target = $region52
        $region51: #{tpu_custom_call.1} parent=43 // pred_region
          %p327 = scmp.lt.s32.totalorder %s26, 1
          %s328 = scalar_select %p327, %s26, 1
          %s329 = scalar_lea.vmem %s2, %s328
        $region52: #{tpu_custom_call.1} parent=43 // pred_fallthru
          _
        // Predicated region
        $region53: #{tpu_custom_call.1} parent=43 // pred_check
          %p330 = pneg %p98
        $region54: #{tpu_custom_call.1} parent=43 // pred_check_branch
          %332 = sbr.rel (%p330) target = $region56
        $region55: #{tpu_custom_call.1} parent=43 // pred_region
          %p333 = scmp.lt.s32.totalorder %s26, 1
          %s334 = scalar_select %p333, %s26, 1
          %s335 = smul.addr %s334, 8
          %s336 = scalar_lea.vmem %s3, %s335
        $region56: #{tpu_custom_call.1} parent=43 // pred_fallthru
          _
      $region44: #{tpu_custom_call.1} parent=5 // pred_fallthru
        _
      %p337 = scmp.le.s32.totalorder 1, %s26
      %p338 = scmp.lt.s32.totalorder %s26, 3
      %p339 = pnand %p337, %p338
      %p340 = pneg %p339
      // Predicated region
      $region57: #{tpu_custom_call.1} parent=5 // pred_check
        _
      $region58: #{tpu_custom_call.1} parent=5 // pred_check_branch
        %342 = sbr.rel (%p339) target = $region60
      $region59: #{tpu_custom_call.1} parent=5 // pred_region
        %s343 = ssub.s32 %s26, 1
        %p344 = scmp.lt.s32.totalorder %s31, 1
        %s345 = scalar_select %p344, %s31, 1
        %s346 = smul.addr %s345, 8
        %s347 = scalar_lea.vmem %s1, %s346
        %p348 = pneg %p52
        %p349 = pneg %p49
        %p350 = scmp.lt.s32.totalorder %s31, 1
        %s351 = scalar_select %p350, %s31, 1
        %s352 = scalar_lea.vmem %s2, %s351
        %p353 = pneg %p78
        %p354 = pneg %p75
        %p355 = scmp.lt.s32.totalorder %s31, 1
        %s356 = scalar_select %p355, %s31, 1
        %s357 = smul.addr %s356, 8
        %s358 = scalar_lea.vmem %s3, %s357
        %p359 = pneg %p104
        %p360 = pneg %p101
        %p361 = pneg %p125
        %p362 = pneg %p122
        %p363 = pneg %p146
        %p364 = pneg %p143
        %p365 = pneg %p167
        %p366 = pneg %p164
        %p367 = pneg %p188
        %p368 = pneg %p185
        %p369 = pneg %p209
        %p370 = pneg %p206
        %p371 = pneg %p230
        %p372 = pneg %p227
        %p373 = pneg %p251
        %p374 = pneg %p248
        %p375 = pneg %p277
        %p376 = pneg %p274
        %s377 = sand.u32 %s264, 1
        %s378 = scalar_lea.sflag [#allocation5], %s377
        %s379 = sand.u32 %s264, 1
        %s380 = smul.addr %s379, 8
        %s381 = scalar_lea.vmem [#allocation4], %s380
        %p382 = scmp.lt.s32.totalorder %s31, 1
        %s383 = scalar_select %p382, %s31, 1
        %s384 = smul.addr %s383, 8
        %s385 = scalar_lea.vmem %s1, %s384
        %p386 = scmp.lt.s32.totalorder %s31, 1
        %s387 = scalar_select %p386, %s31, 1
        %s388 = scalar_lea.vmem %s2, %s387
        %p389 = scmp.lt.s32.totalorder %s31, 1
        %s390 = scalar_select %p389, %s31, 1
        %s391 = smul.addr %s390, 8
        %s392 = scalar_lea.vmem %s3, %s391
        %s393 = sld [smem:[#allocation3 + %s31]]
        %v394 = vld [vmem:[%s385] sm:$0xff]
        %v395 = vld [vmem:[%s388] sm:$0x1]
        %v396 = vlaneseq
        %v397 = vshrl.u32 %v396, 7
        %v398 = vlaneseq
        %v399 = vand.u32 %v398, 127
        %v400 = vstv %s393
        %vm401 = vcmp.lt.s32.totalorder %v397, %v400
        %vm402 = vcmp.lt.s32.totalorder %v399, %v400
        %vm403 = vmand %vm401, %vm402
        %404 = vset.pattern.permute.xlu0 0
        %405 = vperm.xlu0 %404, %v394
        %v406 = vpop.permute.xlu0 %405
        %v407 = vlaneseq
        %v408 = vshrl.u32 %v407, 7
        %v409 = vsub.s32 0, %v408
        %v410 = vrot.slane %v395, %v409
        %vm411 = vcmp.eq.s32.totalorder %v406, %v410
        %vm412 = vcmp.ne.s32.totalorder %v394, 0
        %v413 = vsel %vm412, 1, 0
        %414 = vset.pattern.permute.xlu0 0
        %415 = vperm.xlu0 %414, %v413
        %v416 = vpop.permute.xlu0 %415
        %vm417 = vcmp.eq.s32.totalorder %v416, 1
        %vm418 = vmand %vm411, %vm417
        %vm419 = vcmp.eq.s32.totalorder %v397, %v399
        %vm420 = vmor %vm418, %vm419
        %vm421 = vmand %vm420, %vm403
        %v422 = vsel %vm421, 1.0, 0.0
        %vm423 = vcmask 64512
        %v424 = vsel %vm423, %v422, 0.0
        %425 = vadd.xlane.f32.xlu0 %v424
        %v426 = vpop.xlane.xlu0 %425
        %vm427 = vcmp.gt.f32.partialorder %v426, 0.0
        %v428 = vmax.f32 %v426, 1.0
        %v429 = vrcp.pop %v428
        %v430 = vmul.f32 1.0, %v429
        %v431 = vsel %vm427, %v430, 0.0
        %v432 = vmul.f32 %v422, %v431
        %v433 = vld [vmem:[%s392] sm:$0xff]
        %v435 = vsel %vm423, %v432, 0
        %437 = vmatprep.subr.mxu0 0.0
        %438 = vmatpush1.msra.mxu0 %v433
        %439 = vmatprep.subr.mxu0 0.0
        %440 = vmatpush1.msra.mxu0 0.0
        %441 = vmatprep.subr.mxu0 0.0
        %442 = vmatpush1.msra.mxu0 0.0
        %443 = vmatprep.subr.mxu0 0.0
        %444 = vmatpush1.msra.mxu0 0.0
        %445 = vmatprep.subr.mxu0 0.0
        %446 = vmatpush1.msra.mxu0 0.0
        %447 = vmatprep.subr.mxu0 0.0
        %448 = vmatpush1.msra.mxu0 0.0
        %449 = vmatprep.subr.mxu0 0.0
        %450 = vmatpush1.msra.mxu0 0.0
        %451 = vmatprep.subr.mxu0 0.0
        %452 = vmatpush1.msra.mxu0 0.0
        %453 = vmatprep.subr.mxu0 0.0
        %454 = vmatpush1.msra.mxu0 0.0
        %455 = vmatprep.subr.mxu0 0.0
        %456 = vmatpush1.msra.mxu0 0.0
        %457 = vmatprep.subr.mxu0 0.0
        %458 = vmatpush1.msra.mxu0 0.0
        %459 = vmatprep.subr.mxu0 0.0
        %460 = vmatpush1.msra.mxu0 0.0
        %461 = vmatprep.subr.mxu0 0.0
        %462 = vmatpush1.msra.mxu0 0.0
        %463 = vmatprep.subr.mxu0 0.0
        %464 = vmatpush1.msra.mxu0 0.0
        %465 = vmatprep.subr.mxu0 0.0
        %466 = vmatpush1.msra.mxu0 0.0
        %467 = vmatprep.subr.mxu0 0.0
        %468 = vmatpush1.msra.mxu0 0.0
        %469 = vmatprep.subr.mxu0 0.0
        %470 = vmatpush1.msra.mxu0 0.0
        %471 = vmatprep.subr.mxu0 0.0
        %472 = vmatpush1.msra.mxu0 0.0
        %473 = vmatprep.subr.mxu0 0.0
        %474 = vmatpush1.msra.mxu0 0.0
        %475 = vmatprep.subr.mxu0 0.0
        %476 = vmatpush1.msra.mxu0 0.0
        %477 = vmatprep.subr.mxu0 0.0
        %478 = vmatpush1.msra.mxu0 0.0
        %479 = vmatprep.subr.mxu0 0.0
        %480 = vmatpush1.msra.mxu0 0.0
        %481 = vmatprep.subr.mxu0 0.0
        %482 = vmatpush1.msra.mxu0 0.0
        %483 = vmatprep.subr.mxu0 0.0
        %484 = vmatpush1.msra.mxu0 0.0
        %485 = vmatprep.subr.mxu0 0.0
        %486 = vmatpush1.msra.mxu0 0.0
        %487 = vmatprep.subr.mxu0 0.0
        %488 = vmatpush1.msra.mxu0 0.0
        %489 = vmatprep.subr.mxu0 0.0
        %490 = vmatpush1.msra.mxu0 0.0
        %491 = vmatprep.subr.mxu0 0.0
        %492 = vmatpush1.msra.mxu0 0.0
        %493 = vmatprep.subr.mxu0 0.0
        %494 = vmatpush1.msra.mxu0 0.0
        %495 = vmatprep.subr.mxu0 0.0
        %496 = vmatpush1.msra.mxu0 0.0
        %497 = vmatprep.subr.mxu0 0.0
        %498 = vmatpush1.msra.mxu0 0.0
        %499 = vmatprep.subr.mxu0 0.0
        %500 = vmatpush1.msra.mxu0 0.0
        %501 = vmatprep.mubr.f32.mxu0 0.0
        %502 = vmatmul.mubr.f32.gmra.mrb[0].mxu0 %v435
        %v503 = vpop.f32.mrb[0].mxu0
        %v504 = vadd.f32 0.0, %v503
        %v505 = vpop.f32.mrb[0].mxu0
        %506 = vdwg.mxu0
        %v507 = vld [vmem:[%s4] sm:$0xff]
        %v508 = vld [vmem:[%s4 + $0x8] sm:$0xff]
        %v509 = vld [vmem:[%s4 + $0x10] sm:$0xff]
        %v510 = vld [vmem:[%s4 + $0x18] sm:$0xff]
        %v511 = vld [vmem:[%s4 + $0x20] sm:$0xff]
        %vm512 = vcmask 326656
        %v514 = vsel %vm512, %v504, 0
        %516 = vmatprep.subr.mxu0 0.0
        %517 = vmatpush1.msra.mxu0 %v507
        %518 = vmatprep.subr.mxu0 0.0
        %519 = vmatpush1.msra.mxu0 %v508
        %520 = vmatprep.subr.mxu0 0.0
        %521 = vmatpush1.msra.mxu0 %v509
        %522 = vmatprep.subr.mxu0 0.0
        %523 = vmatpush1.msra.mxu0 %v510
        %524 = vmatprep.subr.mxu0 0.0
        %525 = vmatpush1.msra.mxu0 %v511
        %526 = vmatprep.subr.mxu0 0.0
        %527 = vmatpush1.msra.mxu0 0.0
        %528 = vmatprep.subr.mxu0 0.0
        %529 = vmatpush1.msra.mxu0 0.0
        %530 = vmatprep.subr.mxu0 0.0
        %531 = vmatpush1.msra.mxu0 0.0
        %532 = vmatprep.subr.mxu0 0.0
        %533 = vmatpush1.msra.mxu0 0.0
        %534 = vmatprep.subr.mxu0 0.0
        %535 = vmatpush1.msra.mxu0 0.0
        %536 = vmatprep.subr.mxu0 0.0
        %537 = vmatpush1.msra.mxu0 0.0
        %538 = vmatprep.subr.mxu0 0.0
        %539 = vmatpush1.msra.mxu0 0.0
        %540 = vmatprep.subr.mxu0 0.0
        %541 = vmatpush1.msra.mxu0 0.0
        %542 = vmatprep.subr.mxu0 0.0
        %543 = vmatpush1.msra.mxu0 0.0
        %544 = vmatprep.subr.mxu0 0.0
        %545 = vmatpush1.msra.mxu0 0.0
        %546 = vmatprep.subr.mxu0 0.0
        %547 = vmatpush1.msra.mxu0 0.0
        %548 = vmatprep.subr.mxu0 0.0
        %549 = vmatpush1.msra.mxu0 0.0
        %550 = vmatprep.subr.mxu0 0.0
        %551 = vmatpush1.msra.mxu0 0.0
        %552 = vmatprep.subr.mxu0 0.0
        %553 = vmatpush1.msra.mxu0 0.0
        %554 = vmatprep.subr.mxu0 0.0
        %555 = vmatpush1.msra.mxu0 0.0
        %556 = vmatprep.subr.mxu0 0.0
        %557 = vmatpush1.msra.mxu0 0.0
        %558 = vmatprep.subr.mxu0 0.0
        %559 = vmatpush1.msra.mxu0 0.0
        %560 = vmatprep.subr.mxu0 0.0
        %561 = vmatpush1.msra.mxu0 0.0
        %562 = vmatprep.subr.mxu0 0.0
        %563 = vmatpush1.msra.mxu0 0.0
        %564 = vmatprep.subr.mxu0 0.0
        %565 = vmatpush1.msra.mxu0 0.0
        %566 = vmatprep.subr.mxu0 0.0
        %567 = vmatpush1.msra.mxu0 0.0
        %568 = vmatprep.subr.mxu0 0.0
        %569 = vmatpush1.msra.mxu0 0.0
        %570 = vmatprep.subr.mxu0 0.0
        %571 = vmatpush1.msra.mxu0 0.0
        %572 = vmatprep.subr.mxu0 0.0
        %573 = vmatpush1.msra.mxu0 0.0
        %574 = vmatprep.subr.mxu0 0.0
        %575 = vmatpush1.msra.mxu0 0.0
        %576 = vmatprep.subr.mxu0 0.0
        %577 = vmatpush1.msra.mxu0 0.0
        %578 = vmatprep.subr.mxu0 0.0
        %579 = vmatpush1.msra.mxu0 0.0
        %580 = vmatprep.mubr.f32.mxu0 0.0
        %581 = vmatmul.mubr.f32.gmra.mrb[0].mxu0 %v514
        %v582 = vpop.f32.mrb[0].mxu0
        %v583 = vadd.f32 0.0, %v582
        %v584 = vpop.f32.mrb[0].mxu0
        %585 = vdwg.mxu0
        %v586 = vmax.f32 %v583, 0.0
        %v587 = vld [vmem:[%s5] sm:$0xff]
        %v588 = vld [vmem:[%s5 + $0x8] sm:$0xff]
        %v589 = vld [vmem:[%s5 + $0x10] sm:$0xff]
        %v590 = vld [vmem:[%s5 + $0x18] sm:$0xff]
        %v591 = vld [vmem:[%s5 + $0x20] sm:$0xff]
        %v592 = vld [vmem:[%s5 + $0x28] sm:$0xff]
        %v593 = vld [vmem:[%s5 + $0x30] sm:$0xff]
        %v594 = vld [vmem:[%s5 + $0x38] sm:$0xff]
        %v595 = vld [vmem:[%s5 + $0x40] sm:$0xff]
        %vm596 = vcmask 588800
        %v598 = vsel %vm596, %v586, 0
        %600 = vmatprep.subr.mxu0 0.0
        %601 = vmatpush1.msra.mxu0 %v587
        %602 = vmatprep.subr.mxu0 0.0
        %603 = vmatpush1.msra.mxu0 %v588
        %604 = vmatprep.subr.mxu0 0.0
        %605 = vmatpush1.msra.mxu0 %v589
        %606 = vmatprep.subr.mxu0 0.0
        %607 = vmatpush1.msra.mxu0 %v590
        %608 = vmatprep.subr.mxu0 0.0
        %609 = vmatpush1.msra.mxu0 %v591
        %610 = vmatprep.subr.mxu0 0.0
        %611 = vmatpush1.msra.mxu0 %v592
        %612 = vmatprep.subr.mxu0 0.0
        %613 = vmatpush1.msra.mxu0 %v593
        %614 = vmatprep.subr.mxu0 0.0
        %615 = vmatpush1.msra.mxu0 %v594
        %616 = vmatprep.subr.mxu0 0.0
        %617 = vmatpush1.msra.mxu0 %v595
        %618 = vmatprep.subr.mxu0 0.0
        %619 = vmatpush1.msra.mxu0 0.0
        %620 = vmatprep.subr.mxu0 0.0
        %621 = vmatpush1.msra.mxu0 0.0
        %622 = vmatprep.subr.mxu0 0.0
        %623 = vmatpush1.msra.mxu0 0.0
        %624 = vmatprep.subr.mxu0 0.0
        %625 = vmatpush1.msra.mxu0 0.0
        %626 = vmatprep.subr.mxu0 0.0
        %627 = vmatpush1.msra.mxu0 0.0
        %628 = vmatprep.subr.mxu0 0.0
        %629 = vmatpush1.msra.mxu0 0.0
        %630 = vmatprep.subr.mxu0 0.0
        %631 = vmatpush1.msra.mxu0 0.0
        %632 = vmatprep.subr.mxu0 0.0
        %633 = vmatpush1.msra.mxu0 0.0
        %634 = vmatprep.subr.mxu0 0.0
        %635 = vmatpush1.msra.mxu0 0.0
        %636 = vmatprep.subr.mxu0 0.0
        %637 = vmatpush1.msra.mxu0 0.0
        %638 = vmatprep.subr.mxu0 0.0
        %639 = vmatpush1.msra.mxu0 0.0
        %640 = vmatprep.subr.mxu0 0.0
        %641 = vmatpush1.msra.mxu0 0.0
        %642 = vmatprep.subr.mxu0 0.0
        %643 = vmatpush1.msra.mxu0 0.0
        %644 = vmatprep.subr.mxu0 0.0
        %645 = vmatpush1.msra.mxu0 0.0
        %646 = vmatprep.subr.mxu0 0.0
        %647 = vmatpush1.msra.mxu0 0.0
        %648 = vmatprep.subr.mxu0 0.0
        %649 = vmatpush1.msra.mxu0 0.0
        %650 = vmatprep.subr.mxu0 0.0
        %651 = vmatpush1.msra.mxu0 0.0
        %652 = vmatprep.subr.mxu0 0.0
        %653 = vmatpush1.msra.mxu0 0.0
        %654 = vmatprep.subr.mxu0 0.0
        %655 = vmatpush1.msra.mxu0 0.0
        %656 = vmatprep.subr.mxu0 0.0
        %657 = vmatpush1.msra.mxu0 0.0
        %658 = vmatprep.subr.mxu0 0.0
        %659 = vmatpush1.msra.mxu0 0.0
        %660 = vmatprep.subr.mxu0 0.0
        %661 = vmatpush1.msra.mxu0 0.0
        %662 = vmatprep.subr.mxu0 0.0
        %663 = vmatpush1.msra.mxu0 0.0
        %664 = vmatprep.mubr.f32.mxu0 0.0
        %665 = vmatmul.mubr.f32.gmra.mrb[0].mxu0 %v598
        %v666 = vpop.f32.mrb[0].mxu0
        %v667 = vadd.f32 0.0, %v666
        %v668 = vpop.f32.mrb[0].mxu0
        %669 = vdwg.mxu0
        %670 = vmatprep.subr.mxu0 0.0
        %671 = vmatpush1.msra.mxu0 %v667
        %672 = vmatprep.subr.mxu0 0.0
        %673 = vmatpush1.msra.mxu0 0.0
        %674 = vmatprep.subr.mxu0 0.0
        %675 = vmatpush1.msra.mxu0 0.0
        %676 = vmatprep.subr.mxu0 0.0
        %677 = vmatpush1.msra.mxu0 0.0
        %678 = vmatprep.subr.mxu0 0.0
        %679 = vmatpush1.msra.mxu0 0.0
        %680 = vmatprep.subr.mxu0 0.0
        %681 = vmatpush1.msra.mxu0 0.0
        %682 = vmatprep.subr.mxu0 0.0
        %683 = vmatpush1.msra.mxu0 0.0
        %684 = vmatprep.subr.mxu0 0.0
        %685 = vmatpush1.msra.mxu0 0.0
        %686 = vmatprep.subr.mxu0 0.0
        %687 = vmatpush1.msra.mxu0 0.0
        %688 = vmatprep.subr.mxu0 0.0
        %689 = vmatpush1.msra.mxu0 0.0
        %690 = vmatprep.subr.mxu0 0.0
        %691 = vmatpush1.msra.mxu0 0.0
        %692 = vmatprep.subr.mxu0 0.0
        %693 = vmatpush1.msra.mxu0 0.0
        %694 = vmatprep.subr.mxu0 0.0
        %695 = vmatpush1.msra.mxu0 0.0
        %696 = vmatprep.subr.mxu0 0.0
        %697 = vmatpush1.msra.mxu0 0.0
        %698 = vmatprep.subr.mxu0 0.0
        %699 = vmatpush1.msra.mxu0 0.0
        %700 = vmatprep.subr.mxu0 0.0
        %701 = vmatpush1.msra.mxu0 0.0
        %702 = vmatprep.subr.mxu0 0.0
        %703 = vmatpush1.msra.mxu0 0.0
        %704 = vmatprep.subr.mxu0 0.0
        %705 = vmatpush1.msra.mxu0 0.0
        %706 = vmatprep.subr.mxu0 0.0
        %707 = vmatpush1.msra.mxu0 0.0
        %708 = vmatprep.subr.mxu0 0.0
        %709 = vmatpush1.msra.mxu0 0.0
        %710 = vmatprep.subr.mxu0 0.0
        %711 = vmatpush1.msra.mxu0 0.0
        %712 = vmatprep.subr.mxu0 0.0
        %713 = vmatpush1.msra.mxu0 0.0
        %714 = vmatprep.subr.mxu0 0.0
        %715 = vmatpush1.msra.mxu0 0.0
        %716 = vmatprep.subr.mxu0 0.0
        %717 = vmatpush1.msra.mxu0 0.0
        %718 = vmatprep.subr.mxu0 0.0
        %719 = vmatpush1.msra.mxu0 0.0
        %720 = vmatprep.subr.mxu0 0.0
        %721 = vmatpush1.msra.mxu0 0.0
        %722 = vmatprep.subr.mxu0 0.0
        %723 = vmatpush1.msra.mxu0 0.0
        %724 = vmatprep.subr.mxu0 0.0
        %725 = vmatpush1.msra.mxu0 0.0
        %726 = vmatprep.subr.mxu0 0.0
        %727 = vmatpush1.msra.mxu0 0.0
        %728 = vmatprep.subr.mxu0 0.0
        %729 = vmatpush1.msra.mxu0 0.0
        %730 = vmatprep.subr.mxu0 0.0
        %731 = vmatpush1.msra.mxu0 0.0
        %732 = vmatprep.subr.mxu0 0.0
        %733 = vmatpush1.msra.mxu0 0.0
        %734 = vmatprep.mubr.f32.mxu0 0.0
        %735 = vmatmul.mubr.f32.gmra.mrb[0].mxu0 %v435
        %v736 = vpop.f32.mrb[0].mxu0
        %v737 = vadd.f32 0.0, %v736
        %v738 = vpop.f32.mrb[0].mxu0
        %739 = vdwg.mxu0
        %v740 = vmax.f32 %v737, 0.0
        %v741 = vrot.slane %v431, 4
        %v742 = vadd.f32 %v431, %v741
        %v743 = vrot.slane %v742, 2
        %v744 = vadd.f32 %v742, %v743
        %v745 = vrot.slane %v744, 1
        %v746 = vadd.f32 %v744, %v745
        %v747 = vmax.f32 %v746, 1.0
        %v748 = vmul.f32 %v740, %v431
        %vm749 = vcmask 130048
        %v750 = vsel %vm749, %v748, 0.0
        %v751 = vrot.slane %v750, 4
        %v752 = vadd.f32 %v750, %v751
        %v753 = vrot.slane %v752, 2
        %v754 = vadd.f32 %v752, %v753
        %v755 = vrot.slane %v754, 1
        %v756 = vadd.f32 %v754, %v755
        %v757 = vrcp.pop %v747
        %v758 = vmul.f32 %v756, %v757
        %v759 = vld [vmem:[%s6] sm:$0xff]
        %v760 = vld [vmem:[%s6 + $0x8] sm:$0xff]
        %v762 = vsel %vm749, %v758, 0
        %764 = vmatprep.subr.mxu0 0.0
        %765 = vmatpush1.msra.mxu0 %v759
        %766 = vmatprep.subr.mxu0 0.0
        %767 = vmatpush1.msra.mxu0 %v760
        %768 = vmatprep.subr.mxu0 0.0
        %769 = vmatpush1.msra.mxu0 0.0
        %770 = vmatprep.subr.mxu0 0.0
        %771 = vmatpush1.msra.mxu0 0.0
        %772 = vmatprep.subr.mxu0 0.0
        %773 = vmatpush1.msra.mxu0 0.0
        %774 = vmatprep.subr.mxu0 0.0
        %775 = vmatpush1.msra.mxu0 0.0
        %776 = vmatprep.subr.mxu0 0.0
        %777 = vmatpush1.msra.mxu0 0.0
        %778 = vmatprep.subr.mxu0 0.0
        %779 = vmatpush1.msra.mxu0 0.0
        %780 = vmatprep.subr.mxu0 0.0
        %781 = vmatpush1.msra.mxu0 0.0
        %782 = vmatprep.subr.mxu0 0.0
        %783 = vmatpush1.msra.mxu0 0.0
        %784 = vmatprep.subr.mxu0 0.0
        %785 = vmatpush1.msra.mxu0 0.0
        %786 = vmatprep.subr.mxu0 0.0
        %787 = vmatpush1.msra.mxu0 0.0
        %788 = vmatprep.subr.mxu0 0.0
        %789 = vmatpush1.msra.mxu0 0.0
        %790 = vmatprep.subr.mxu0 0.0
        %791 = vmatpush1.msra.mxu0 0.0
        %792 = vmatprep.subr.mxu0 0.0
        %793 = vmatpush1.msra.mxu0 0.0
        %794 = vmatprep.subr.mxu0 0.0
        %795 = vmatpush1.msra.mxu0 0.0
        %796 = vmatprep.subr.mxu0 0.0
        %797 = vmatpush1.msra.mxu0 0.0
        %798 = vmatprep.subr.mxu0 0.0
        %799 = vmatpush1.msra.mxu0 0.0
        %800 = vmatprep.subr.mxu0 0.0
        %801 = vmatpush1.msra.mxu0 0.0
        %802 = vmatprep.subr.mxu0 0.0
        %803 = vmatpush1.msra.mxu0 0.0
        %804 = vmatprep.subr.mxu0 0.0
        %805 = vmatpush1.msra.mxu0 0.0
        %806 = vmatprep.subr.mxu0 0.0
        %807 = vmatpush1.msra.mxu0 0.0
        %808 = vmatprep.subr.mxu0 0.0
        %809 = vmatpush1.msra.mxu0 0.0
        %810 = vmatprep.subr.mxu0 0.0
        %811 = vmatpush1.msra.mxu0 0.0
        %812 = vmatprep.subr.mxu0 0.0
        %813 = vmatpush1.msra.mxu0 0.0
        %814 = vmatprep.subr.mxu0 0.0
        %815 = vmatpush1.msra.mxu0 0.0
        %816 = vmatprep.subr.mxu0 0.0
        %817 = vmatpush1.msra.mxu0 0.0
        %818 = vmatprep.subr.mxu0 0.0
        %819 = vmatpush1.msra.mxu0 0.0
        %820 = vmatprep.subr.mxu0 0.0
        %821 = vmatpush1.msra.mxu0 0.0
        %822 = vmatprep.subr.mxu0 0.0
        %823 = vmatpush1.msra.mxu0 0.0
        %824 = vmatprep.subr.mxu0 0.0
        %825 = vmatpush1.msra.mxu0 0.0
        %826 = vmatprep.subr.mxu0 0.0
        %827 = vmatpush1.msra.mxu0 0.0
        %828 = vmatprep.mubr.f32.mxu0 0.0
        %829 = vmatmul.mubr.f32.gmra.mrb[0].mxu0 %v762
        %v830 = vpop.f32.mrb[0].mxu0
        %v831 = vadd.f32 0.0, %v830
        %v832 = vpop.f32.mrb[0].mxu0
        %833 = vdwg.mxu0
        %v834 = vmax.f32 %v831, 0.0
        %v835 = vld [vmem:[%s7] sm:$0xff]
        %v836 = vld [vmem:[%s7 + $0x8] sm:$0xff]
        %v837 = vld [vmem:[%s7 + $0x10] sm:$0xff]
        %v838 = vld [vmem:[%s7 + $0x18] sm:$0xff]
        %v839 = vld [vmem:[%s7 + $0x20] sm:$0xff]
        %v840 = vld [vmem:[%s7 + $0x28] sm:$0xff]
        %v841 = vld [vmem:[%s7 + $0x30] sm:$0xff]
        %v842 = vld [vmem:[%s7 + $0x38] sm:$0xff]
        %v843 = vld [vmem:[%s7 + $0x40] sm:$0xff]
        %v845 = vsel %vm596, %v834, 0
        %847 = vmatprep.subr.mxu0 0.0
        %848 = vmatpush1.msra.mxu0 %v835
        %849 = vmatprep.subr.mxu0 0.0
        %850 = vmatpush1.msra.mxu0 %v836
        %851 = vmatprep.subr.mxu0 0.0
        %852 = vmatpush1.msra.mxu0 %v837
        %853 = vmatprep.subr.mxu0 0.0
        %854 = vmatpush1.msra.mxu0 %v838
        %855 = vmatprep.subr.mxu0 0.0
        %856 = vmatpush1.msra.mxu0 %v839
        %857 = vmatprep.subr.mxu0 0.0
        %858 = vmatpush1.msra.mxu0 %v840
        %859 = vmatprep.subr.mxu0 0.0
        %860 = vmatpush1.msra.mxu0 %v841
        %861 = vmatprep.subr.mxu0 0.0
        %862 = vmatpush1.msra.mxu0 %v842
        %863 = vmatprep.subr.mxu0 0.0
        %864 = vmatpush1.msra.mxu0 %v843
        %865 = vmatprep.subr.mxu0 0.0
        %866 = vmatpush1.msra.mxu0 0.0
        %867 = vmatprep.subr.mxu0 0.0
        %868 = vmatpush1.msra.mxu0 0.0
        %869 = vmatprep.subr.mxu0 0.0
        %870 = vmatpush1.msra.mxu0 0.0
        %871 = vmatprep.subr.mxu0 0.0
        %872 = vmatpush1.msra.mxu0 0.0
        %873 = vmatprep.subr.mxu0 0.0
        %874 = vmatpush1.msra.mxu0 0.0
        %875 = vmatprep.subr.mxu0 0.0
        %876 = vmatpush1.msra.mxu0 0.0
        %877 = vmatprep.subr.mxu0 0.0
        %878 = vmatpush1.msra.mxu0 0.0
        %879 = vmatprep.subr.mxu0 0.0
        %880 = vmatpush1.msra.mxu0 0.0
        %881 = vmatprep.subr.mxu0 0.0
        %882 = vmatpush1.msra.mxu0 0.0
        %883 = vmatprep.subr.mxu0 0.0
        %884 = vmatpush1.msra.mxu0 0.0
        %885 = vmatprep.subr.mxu0 0.0
        %886 = vmatpush1.msra.mxu0 0.0
        %887 = vmatprep.subr.mxu0 0.0
        %888 = vmatpush1.msra.mxu0 0.0
        %889 = vmatprep.subr.mxu0 0.0
        %890 = vmatpush1.msra.mxu0 0.0
        %891 = vmatprep.subr.mxu0 0.0
        %892 = vmatpush1.msra.mxu0 0.0
        %893 = vmatprep.subr.mxu0 0.0
        %894 = vmatpush1.msra.mxu0 0.0
        %895 = vmatprep.subr.mxu0 0.0
        %896 = vmatpush1.msra.mxu0 0.0
        %897 = vmatprep.subr.mxu0 0.0
        %898 = vmatpush1.msra.mxu0 0.0
        %899 = vmatprep.subr.mxu0 0.0
        %900 = vmatpush1.msra.mxu0 0.0
        %901 = vmatprep.subr.mxu0 0.0
        %902 = vmatpush1.msra.mxu0 0.0
        %903 = vmatprep.subr.mxu0 0.0
        %904 = vmatpush1.msra.mxu0 0.0
        %905 = vmatprep.subr.mxu0 0.0
        %906 = vmatpush1.msra.mxu0 0.0
        %907 = vmatprep.subr.mxu0 0.0
        %908 = vmatpush1.msra.mxu0 0.0
        %909 = vmatprep.subr.mxu0 0.0
        %910 = vmatpush1.msra.mxu0 0.0
        %911 = vmatprep.mubr.f32.mxu0 0.0
        %912 = vmatmul.mubr.f32.gmra.mrb[0].mxu0 %v845
        %v913 = vpop.f32.mrb[0].mxu0
        %v914 = vadd.f32 0.0, %v913
        %v915 = vpop.f32.mrb[0].mxu0
        %916 = vdwg.mxu0
        %v917 = vmax.f32 %v914, 0.0
        %v918 = vld [vmem:[%s9] sm:$0xff]
        %v919 = vld [vmem:[%s9 + $0x8] sm:$0xff]
        %v921 = vsel %vm749, %v917, 0
        %923 = vmatprep.subr.mxu0 0.0
        %924 = vmatpush1.msra.mxu0 %v918
        %925 = vmatprep.subr.mxu0 0.0
        %926 = vmatpush1.msra.mxu0 %v919
        %927 = vmatprep.subr.mxu0 0.0
        %928 = vmatpush1.msra.mxu0 0.0
        %929 = vmatprep.subr.mxu0 0.0
        %930 = vmatpush1.msra.mxu0 0.0
        %931 = vmatprep.subr.mxu0 0.0
        %932 = vmatpush1.msra.mxu0 0.0
        %933 = vmatprep.subr.mxu0 0.0
        %934 = vmatpush1.msra.mxu0 0.0
        %935 = vmatprep.subr.mxu0 0.0
        %936 = vmatpush1.msra.mxu0 0.0
        %937 = vmatprep.subr.mxu0 0.0
        %938 = vmatpush1.msra.mxu0 0.0
        %939 = vmatprep.subr.mxu0 0.0
        %940 = vmatpush1.msra.mxu0 0.0
        %941 = vmatprep.subr.mxu0 0.0
        %942 = vmatpush1.msra.mxu0 0.0
        %943 = vmatprep.subr.mxu0 0.0
        %944 = vmatpush1.msra.mxu0 0.0
        %945 = vmatprep.subr.mxu0 0.0
        %946 = vmatpush1.msra.mxu0 0.0
        %947 = vmatprep.subr.mxu0 0.0
        %948 = vmatpush1.msra.mxu0 0.0
        %949 = vmatprep.subr.mxu0 0.0
        %950 = vmatpush1.msra.mxu0 0.0
        %951 = vmatprep.subr.mxu0 0.0
        %952 = vmatpush1.msra.mxu0 0.0
        %953 = vmatprep.subr.mxu0 0.0
        %954 = vmatpush1.msra.mxu0 0.0
        %955 = vmatprep.subr.mxu0 0.0
        %956 = vmatpush1.msra.mxu0 0.0
        %957 = vmatprep.subr.mxu0 0.0
        %958 = vmatpush1.msra.mxu0 0.0
        %959 = vmatprep.subr.mxu0 0.0
        %960 = vmatpush1.msra.mxu0 0.0
        %961 = vmatprep.subr.mxu0 0.0
        %962 = vmatpush1.msra.mxu0 0.0
        %963 = vmatprep.subr.mxu0 0.0
        %964 = vmatpush1.msra.mxu0 0.0
        %965 = vmatprep.subr.mxu0 0.0
        %966 = vmatpush1.msra.mxu0 0.0
        %967 = vmatprep.subr.mxu0 0.0
        %968 = vmatpush1.msra.mxu0 0.0
        %969 = vmatprep.subr.mxu0 0.0
        %970 = vmatpush1.msra.mxu0 0.0
        %971 = vmatprep.subr.mxu0 0.0
        %972 = vmatpush1.msra.mxu0 0.0
        %973 = vmatprep.subr.mxu0 0.0
        %974 = vmatpush1.msra.mxu0 0.0
        %975 = vmatprep.subr.mxu0 0.0
        %976 = vmatpush1.msra.mxu0 0.0
        %977 = vmatprep.subr.mxu0 0.0
        %978 = vmatpush1.msra.mxu0 0.0
        %979 = vmatprep.subr.mxu0 0.0
        %980 = vmatpush1.msra.mxu0 0.0
        %981 = vmatprep.subr.mxu0 0.0
        %982 = vmatpush1.msra.mxu0 0.0
        %983 = vmatprep.subr.mxu0 0.0
        %984 = vmatpush1.msra.mxu0 0.0
        %985 = vmatprep.subr.mxu0 0.0
        %986 = vmatpush1.msra.mxu0 0.0
        %987 = vmatprep.mubr.f32.mxu0 0.0
        %988 = vmatmul.mubr.f32.gmra.mrb[0].mxu0 %v921
        %v989 = vpop.f32.mrb[0].mxu0
        %v990 = vadd.f32 0.0, %v989
        %v991 = vpop.f32.mrb[0].mxu0
        %992 = vdwg.mxu0
        %v993 = vld [vmem:[%s8] sm:$0xff]
        %v994 = vld [vmem:[%s8 + $0x8] sm:$0xff]
        %v995 = vlaneseq
        %v996 = vshrl.u32 %v995, 7
        %v997 = vsub.s32 0, %v996
        %v998 = vrot.slane %v990, %v997
        %v999 = vmul.f32 %v431, %v998
        %v1001 = vsel %vm749, %v740, 0
        %1003 = vmatprep.subr.mxu0 0.0
        %1004 = vmatpush1.msra.mxu0 %v993
        %1005 = vmatprep.subr.mxu0 0.0
        %1006 = vmatpush1.msra.mxu0 %v994
        %1007 = vmatprep.subr.mxu0 0.0
        %1008 = vmatpush1.msra.mxu0 0.0
        %1009 = vmatprep.subr.mxu0 0.0
        %1010 = vmatpush1.msra.mxu0 0.0
        %1011 = vmatprep.subr.mxu0 0.0
        %1012 = vmatpush1.msra.mxu0 0.0
        %1013 = vmatprep.subr.mxu0 0.0
        %1014 = vmatpush1.msra.mxu0 0.0
        %1015 = vmatprep.subr.mxu0 0.0
        %1016 = vmatpush1.msra.mxu0 0.0
        %1017 = vmatprep.subr.mxu0 0.0
        %1018 = vmatpush1.msra.mxu0 0.0
        %1019 = vmatprep.subr.mxu0 0.0
        %1020 = vmatpush1.msra.mxu0 0.0
        %1021 = vmatprep.subr.mxu0 0.0
        %1022 = vmatpush1.msra.mxu0 0.0
        %1023 = vmatprep.subr.mxu0 0.0
        %1024 = vmatpush1.msra.mxu0 0.0
        %1025 = vmatprep.subr.mxu0 0.0
        %1026 = vmatpush1.msra.mxu0 0.0
        %1027 = vmatprep.subr.mxu0 0.0
        %1028 = vmatpush1.msra.mxu0 0.0
        %1029 = vmatprep.subr.mxu0 0.0
        %1030 = vmatpush1.msra.mxu0 0.0
        %1031 = vmatprep.subr.mxu0 0.0
        %1032 = vmatpush1.msra.mxu0 0.0
        %1033 = vmatprep.subr.mxu0 0.0
        %1034 = vmatpush1.msra.mxu0 0.0
        %1035 = vmatprep.subr.mxu0 0.0
        %1036 = vmatpush1.msra.mxu0 0.0
        %1037 = vmatprep.subr.mxu0 0.0
        %1038 = vmatpush1.msra.mxu0 0.0
        %1039 = vmatprep.subr.mxu0 0.0
        %1040 = vmatpush1.msra.mxu0 0.0
        %1041 = vmatprep.subr.mxu0 0.0
        %1042 = vmatpush1.msra.mxu0 0.0
        %1043 = vmatprep.subr.mxu0 0.0
        %1044 = vmatpush1.msra.mxu0 0.0
        %1045 = vmatprep.subr.mxu0 0.0
        %1046 = vmatpush1.msra.mxu0 0.0
        %1047 = vmatprep.subr.mxu0 0.0
        %1048 = vmatpush1.msra.mxu0 0.0
        %1049 = vmatprep.subr.mxu0 0.0
        %1050 = vmatpush1.msra.mxu0 0.0
        %1051 = vmatprep.subr.mxu0 0.0
        %1052 = vmatpush1.msra.mxu0 0.0
        %1053 = vmatprep.subr.mxu0 0.0
        %1054 = vmatpush1.msra.mxu0 0.0
        %1055 = vmatprep.subr.mxu0 0.0
        %1056 = vmatpush1.msra.mxu0 0.0
        %1057 = vmatprep.subr.mxu0 0.0
        %1058 = vmatpush1.msra.mxu0 0.0
        %1059 = vmatprep.subr.mxu0 0.0
        %1060 = vmatpush1.msra.mxu0 0.0
        %1061 = vmatprep.subr.mxu0 0.0
        %1062 = vmatpush1.msra.mxu0 0.0
        %1063 = vmatprep.subr.mxu0 0.0
        %1064 = vmatpush1.msra.mxu0 0.0
        %1065 = vmatprep.subr.mxu0 0.0
        %1066 = vmatpush1.msra.mxu0 0.0
        %1067 = vmatprep.mubr.f32.mxu0 0.0
        %1068 = vmatmul.mubr.f32.gmra.mrb[0].mxu0 %v1001
        %v1069 = vpop.f32.mrb[0].mxu0
        %v1070 = vadd.f32 %v999, %v1069
        %v1071 = vpop.f32.mrb[0].mxu0
        %1072 = vdwg.mxu0
        %v1073 = vld [vmem:[%s10] sm:$0x1]
        %v1075 = vlaneseq
        %v1076 = vshrl.u32 %v1075, 7
        %v1077 = vsub.s32 0, %v1076
        %v1078 = vrot.slane %v1073, %v1077
        %v1080 = vadd.f32 %v1070, %v1078
        %vm1081 = vcmask 195584
        %1082 = vst.msk [vmem:[%s381] sm:$0xff] %vm1081, %v1080
        %s1083 = sand.u32 %s264, 1
        %s1084 = scalar_lea.sflag [#allocation5], %s1083
        %s1085 = sand.u32 %s264, 1
        %s1086 = smul.addr %s1085, 8
        %s1087 = scalar_lea.vmem [#allocation4], %s1086
        // Predicated region
        $region61: #{tpu_custom_call.1} parent=59 // pred_check
          %p1088 = pneg %p274
        $region62: #{tpu_custom_call.1} parent=59 // pred_check_branch
          %1090 = sbr.rel (%p1088) target = $region64
        $region63: #{tpu_custom_call.1} parent=59 // pred_region
          %s1092 = ssub.s32 128, 128
          %1093 = vsyncadd %s1084, %s1092
          %s1094 = smul.addr %s31, 128
          %s1095 = scalar_lea.hbm %s11, %s1094
          %s1097 = sshll.u32 %s1087, 4
          %s1098 = int_to_ptr.vmem [resolvable:$true] %s1097
          %1100 = dma.vmem_to_hbm [thread:$0]  %s1098, 128, %s1095, %s1084
        $region64: #{tpu_custom_call.1} parent=59 // pred_fallthru
          _
      $region60: #{tpu_custom_call.1} parent=5 // pred_fallthru
        _
      %p1101 = scmp.le.s32.totalorder 2, %s26
      // Predicated region
      $region65: #{tpu_custom_call.1} parent=5 // pred_check
        %p1102 = pneg %p1101
      $region66: #{tpu_custom_call.1} parent=5 // pred_check_branch
        %1104 = sbr.rel (%p1102) target = $region68
      $region67: #{tpu_custom_call.1} parent=5 // pred_region
        %s1105 = ssub.s32 %s26, 2
        // Predicated region
        $region69: #{tpu_custom_call.1} parent=67 // pred_check
          %p1106 = pneg %p280
        $region70: #{tpu_custom_call.1} parent=67 // pred_check_branch
          %1108 = sbr.rel (%p1106) target = $region72
        $region71: #{tpu_custom_call.1} parent=67 // pred_region
          %s1109 = sand.u32 %s265, 1
          %s1110 = scalar_lea.sflag [#allocation5], %s1109
          %s1111 = sand.u32 %s265, 1
          %s1112 = smul.addr %s1111, 8
          %s1113 = scalar_lea.vmem [#allocation4], %s1112
          %1114 = dma.done %s1110, 128
        $region72: #{tpu_custom_call.1} parent=67 // pred_fallthru
          _
      $region68: #{tpu_custom_call.1} parent=5 // pred_fallthru
        _
    $region6: #{tpu_custom_call.1} parent=1 // loop_footer
      %s30 = sadd.s32 1, %s26
    $region7: #{tpu_custom_call.1} parent=1 // loop_footer_branch
      %25 = sbr.rel target = $region3
    $region8: #{tpu_custom_call.1} parent=1 // loop_exit
      _
    %1115 = vsyncpa [#allocation5], 1
    %s1116 = scalar_lea.sflag [#allocation5], 1
    %1117 = vsyncpa %s1116, 1

</llo_original>
